<compile_context>
chip_gen: v6e
topology: v6e:2x2x1
jax: 0.10.0
libtpu: 0.0.40
codegen_flags: <defaults>
</compile_context>

<pallas_src>
import jax
import jax.numpy as jnp
from jax.experimental import pallas as pl
from jax.experimental.pallas import tpu as pltpu


def _fcn_kernel(t_ref, s_ref, p_ref, j_ref,
                w1t_ref, w1s_ref, w1p_ref, w1j_ref, b1_ref,
                w2_ref, b2_ref, w3_ref, b3_ref,
                o_ref):
    f32 = jnp.float32

    # ---- layer 1: "concat" fused as four partial matmuls, f32 accumulation.
    h1 = jnp.dot(t_ref[...], w1t_ref[...], preferred_element_type=f32)
    h1 = h1 + jnp.dot(s_ref[...], w1s_ref[...], preferred_element_type=f32)
    h1 = h1 + jnp.dot(p_ref[...], w1p_ref[...], preferred_element_type=f32)
    h1 = h1 + jnp.dot(j_ref[...], w1j_ref[...], preferred_element_type=f32)
    h1 = jnp.maximum(h1 + b1_ref[...], 0.0)                       # f32 ReLU

    # ---- layer 2
    h2 = jnp.dot(h1.astype(w2_ref.dtype), w2_ref[...], preferred_element_type=f32)
    h2 = jnp.maximum(h2 + b2_ref[...], 0.0)                       # f32 ReLU

    # ---- layer 3 + sigmoid (reciprocal on the EUP slot)
    z = jnp.dot(h2.astype(w3_ref.dtype), w3_ref[...], preferred_element_type=f32)
    z = z + b3_ref[...]
    o_ref[...] = pl.reciprocal(1.0 + jnp.exp(-z), approx=True)


def fcn_forward(tables, samples, predicates, joins, params, *,
                tile_b=512, compute_dtype=jnp.bfloat16):
    """Pallas-backed forward pass of the FCN module.

    tables/samples/predicates/joins: (B, d_g) float arrays.
    params: (w1, b1, w2, b2, w3, b3) with w_k stored as (in, out), b_k as (1, out).
    """
    w1, b1, w2, b2, w3, b3 = params

    batch = tables.shape[0]
    d_t, d_s, d_p, d_j = (tables.shape[1], samples.shape[1],
                          predicates.shape[1], joins.shape[1])
    input_dim = d_t + d_s + d_p + d_j
    hid = w1.shape[1]

    # Split W1 by rows to match each feature group -> no HBM concat of inputs.
    w1_t = w1[:d_t]
    w1_s = w1[d_t:d_t + d_s]
    w1_p = w1[d_t + d_s:d_t + d_s + d_p]
    w1_j = w1[d_t + d_s + d_p:]

    cd = compute_dtype
    x_t = tables.astype(cd)
    x_s = samples.astype(cd)
    x_p = predicates.astype(cd)
    x_j = joins.astype(cd)
    w1_t, w1_s, w1_p, w1_j, w2c, w3c = (w.astype(cd) for w in
                                        (w1_t, w1_s, w1_p, w1_j, w2, w3))
    b1c, b2c, b3c = (b.astype(jnp.float32).reshape(1, -1) for b in (b1, b2, b3))

    # Batch tile: multiple of 8 sublanes, or the full batch if it is smaller.
    if batch <= tile_b:
        tile_b = batch                      # full-extent block is always legal
    else:
        tile_b = max(8, (tile_b // 8) * 8)
    grid = (pl.cdiv(batch, tile_b),)

    def x_spec(d):
        return pl.BlockSpec((tile_b, d), lambda i: (i, 0),
                            memory_space=pltpu.VMEM)

    def resident(a):                        # whole array, DMA'd once, stays in VMEM
        return pl.BlockSpec(a.shape, lambda i: (0, 0),
                            memory_space=pltpu.VMEM)

    out_shape = jax.ShapeDtypeStruct((batch, 1), jnp.float32)

    flops = 2 * batch * (input_dim * hid + hid * hid + hid)
    bytes_accessed = int(
        sum(a.size * a.dtype.itemsize for a in (x_t, x_s, x_p, x_j))
        + sum(w.size * w.dtype.itemsize for w in (w1_t, w1_s, w1_p, w1_j, w2c, w3c))
        + sum(b.size * 4 for b in (b1c, b2c, b3c))
        + batch * 4)
    cost = pl.CostEstimate(flops=flops, transcendentals=batch,
                           bytes_accessed=bytes_accessed)

    return pl.pallas_call(
        _fcn_kernel,
        out_shape=out_shape,
        grid=grid,
        in_specs=[x_spec(d_t), x_spec(d_s), x_spec(d_p), x_spec(d_j),
                  resident(w1_t), resident(w1_s), resident(w1_p), resident(w1_j),
                  resident(b1c),
                  resident(w2c), resident(b2c),
                  resident(w3c), resident(b3c)],
        out_specs=pl.BlockSpec((tile_b, 1), lambda i: (i, 0),
                               memory_space=pltpu.VMEM),
        compiler_params=pltpu.CompilerParams(
            dimension_semantics=("parallel",),        # 2 TCs on v7x
            vmem_limit_bytes=32 * 1024 * 1024),       # fits v5e/v6e/v7x budgets
        cost_estimate=cost,
    )(x_t, x_s, x_p, x_j,
      w1_t, w1_s, w1_p, w1_j, b1c,
      w2c, b2c, w3c, b3c)


def init_fcn_params(key, input_dim, hid_units):
    """nn.Linear-style init (uniform +/- 1/sqrt(fan_in)); weights (in, out), bias (1, out)."""
    ks = jax.random.split(key, 6)

    def lin(kw, kb, fan_in, fan_out):
        bound = 1.0 / jnp.sqrt(jnp.float32(fan_in))
        w = jax.random.uniform(kw, (fan_in, fan_out), jnp.float32, -bound, bound)
        b = jax.random.uniform(kb, (1, fan_out), jnp.float32, -bound, bound)
        return w, b

    w1, b1 = lin(ks[0], ks[1], input_dim, hid_units)
    w2, b2 = lin(ks[2], ks[3], hid_units, hid_units)
    w3, b3 = lin(ks[4], ks[5], hid_units, 1)
    return (w1, b1, w2, b2, w3, b3)


def fcn_reference_f32(tables, samples, predicates, joins, params):
    """Pure-JAX full-f32 reference (mirrors the PyTorch module exactly)."""
    w1, b1, w2, b2, w3, b3 = params
    x = jnp.concatenate([tables, samples, predicates, joins], axis=1).astype(jnp.float32)
    h = jax.nn.relu(x @ w1 + b1)
    h = jax.nn.relu(h @ w2 + b2)
    return jax.nn.sigmoid(h @ w3 + b3)


def fcn_reference_matched(tables, samples, predicates, joins, params,
                          compute_dtype=jnp.bfloat16):
    """Pure-JAX reference mirroring the kernel's dtype path (bf16 operands, f32 acc)."""
    w1, b1, w2, b2, w3, b3 = params
    cd = compute_dtype
    f32 = jnp.float32
    x = jnp.concatenate([tables, samples, predicates, joins], axis=1).astype(cd)
    h = jnp.maximum(jnp.dot(x, w1.astype(cd), preferred_element_type=f32) + b1, 0.0)
    h = jnp.maximum(jnp.dot(h.astype(cd), w2.astype(cd), preferred_element_type=f32) + b2, 0.0)
    z = jnp.dot(h.astype(cd), w3.astype(cd), preferred_element_type=f32) + b3
    return jax.nn.sigmoid(z)


if __name__ == "__main__":
    # Shapes consistent with the module's __init__ (small, but large enough to
    # exercise the batch-tiled grid path: 256 rows, tile of 64 -> 4 grid steps).
    table_feats = 4
    sample_feats = 8
    num_columns = 3
    predicate_feats = 4
    join_feats = 6
    hid_units = 32
    batch = 256

    input_dim = (table_feats + table_feats * sample_feats
                 + num_columns * predicate_feats + join_feats)  # = 54

    key = jax.random.PRNGKey(0)
    k_t, k_s, k_p, k_j, k_w = jax.random.split(key, 5)

    tables = jax.random.normal(k_t, (batch, table_feats), jnp.float32)
    samples = jax.random.normal(k_s, (batch, table_feats * sample_feats), jnp.float32)
    predicates = jax.random.normal(k_p, (batch, num_columns * predicate_feats), jnp.float32)
    joins = jax.random.normal(k_j, (batch, join_feats), jnp.float32)

    params = init_fcn_params(k_w, input_dim, hid_units)

    out = fcn_forward(tables, samples, predicates, joins, params, tile_b=64)
    out = jax.block_until_ready(out)

    ref_matched = fcn_reference_matched(tables, samples, predicates, joins, params)
    ref_f32 = fcn_reference_f32(tables, samples, predicates, joins, params)

    assert out.shape == (batch, 1), out.shape
    assert bool(jnp.all(jnp.isfinite(out))), "non-finite output"
    # Tight check vs a reference that mirrors the kernel's bf16/f32 dtype path
    # (slack covers the EUP approximate reciprocal).
    assert jnp.allclose(out, ref_matched, atol=1e-2, rtol=1e-2), "mismatch vs matched-precision reference"
    # Loose check vs the exact f32 module semantics (slack covers bf16 inputs).
    assert jnp.allclose(out, ref_f32, atol=3e-2, rtol=3e-2), "mismatch vs f32 reference"

    print("KERNEL_OK")
</pallas_src>

<mosaic_0001>
module attributes {stable_mosaic.version = 11 : i64} {
  func.func @_fcn_kernel(%arg0: i32, %arg1: memref<64x4xbf16, #tpu.memory_space<vmem>>, %arg2: memref<64x32xbf16, #tpu.memory_space<vmem>>, %arg3: memref<64x12xbf16, #tpu.memory_space<vmem>>, %arg4: memref<64x6xbf16, #tpu.memory_space<vmem>>, %arg5: memref<4x32xbf16, #tpu.memory_space<vmem>>, %arg6: memref<32x32xbf16, #tpu.memory_space<vmem>>, %arg7: memref<12x32xbf16, #tpu.memory_space<vmem>>, %arg8: memref<6x32xbf16, #tpu.memory_space<vmem>>, %arg9: memref<1x32xf32, #tpu.memory_space<vmem>>, %arg10: memref<32x32xbf16, #tpu.memory_space<vmem>>, %arg11: memref<1x32xf32, #tpu.memory_space<vmem>>, %arg12: memref<32x1xbf16, #tpu.memory_space<vmem>>, %arg13: memref<1x1xf32, #tpu.memory_space<vmem>>, %arg14: memref<64x1xf32, #tpu.memory_space<vmem>>) attributes {dimension_semantics = [#tpu.dimension_semantics<parallel>], iteration_bounds = array<i64: 4>, scalar_prefetch = 0 : i64, scratch_operands = 0 : i64, tpu.core_type = #tpu.core_type<tc>, window_params = [{transform_indices = @transform_0, window_bounds = array<i64: 64, 4>}, {transform_indices = @transform_1, window_bounds = array<i64: 64, 32>}, {transform_indices = @transform_2, window_bounds = array<i64: 64, 12>}, {transform_indices = @transform_3, window_bounds = array<i64: 64, 6>}, {pipeline_mode = #tpu.pipeline_mode<synchronous>, transform_indices = @transform_4, window_bounds = array<i64: 4, 32>}, {pipeline_mode = #tpu.pipeline_mode<synchronous>, transform_indices = @transform_5, window_bounds = array<i64: 32, 32>}, {pipeline_mode = #tpu.pipeline_mode<synchronous>, transform_indices = @transform_6, window_bounds = array<i64: 12, 32>}, {pipeline_mode = #tpu.pipeline_mode<synchronous>, transform_indices = @transform_7, window_bounds = array<i64: 6, 32>}, {pipeline_mode = #tpu.pipeline_mode<synchronous>, transform_indices = @transform_8, window_bounds = array<i64: 1, 32>}, {pipeline_mode = #tpu.pipeline_mode<synchronous>, transform_indices = @transform_9, window_bounds = array<i64: 32, 32>}, {pipeline_mode = #tpu.pipeline_mode<synchronous>, transform_indices = @transform_10, window_bounds = array<i64: 1, 32>}, {pipeline_mode = #tpu.pipeline_mode<synchronous>, transform_indices = @transform_11, window_bounds = array<i64: 32, 1>}, {pipeline_mode = #tpu.pipeline_mode<synchronous>, transform_indices = @transform_12, window_bounds = array<i64: 1, 1>}, {transform_indices = @transform_13, window_bounds = array<i64: 64, 1>}]} {
    %c0 = arith.constant 0 : index
    %c0_0 = arith.constant 0 : index
    %0 = vector.load %arg1[%c0, %c0_0] : memref<64x4xbf16, #tpu.memory_space<vmem>>, vector<64x4xbf16>
    %c0_1 = arith.constant 0 : index
    %c0_2 = arith.constant 0 : index
    %1 = vector.load %arg5[%c0_1, %c0_2] : memref<4x32xbf16, #tpu.memory_space<vmem>>, vector<4x32xbf16>
    %cst = arith.constant dense<0.000000e+00> : vector<64x32xf32>
    %2 = tpu.matmul %0, %1, %cst {dimension_numbers = #tpu.dot_dimension_numbers<[1], [0], [0], [1], [0, 0, 1, 1], [], []>} : vector<64x4xbf16>, vector<4x32xbf16>, vector<64x32xf32> -> vector<64x32xf32>
    %c0_3 = arith.constant 0 : index
    %c0_4 = arith.constant 0 : index
    %3 = vector.load %arg2[%c0_3, %c0_4] : memref<64x32xbf16, #tpu.memory_space<vmem>>, vector<64x32xbf16>
    %c0_5 = arith.constant 0 : index
    %c0_6 = arith.constant 0 : index
    %4 = vector.load %arg6[%c0_5, %c0_6] : memref<32x32xbf16, #tpu.memory_space<vmem>>, vector<32x32xbf16>
    %cst_7 = arith.constant dense<0.000000e+00> : vector<64x32xf32>
    %5 = tpu.matmul %3, %4, %cst_7 {dimension_numbers = #tpu.dot_dimension_numbers<[1], [0], [0], [1], [0, 0, 1, 1], [], []>} : vector<64x32xbf16>, vector<32x32xbf16>, vector<64x32xf32> -> vector<64x32xf32>
    %6 = arith.addf %2, %5 : vector<64x32xf32>
    %c0_8 = arith.constant 0 : index
    %c0_9 = arith.constant 0 : index
    %7 = vector.load %arg3[%c0_8, %c0_9] : memref<64x12xbf16, #tpu.memory_space<vmem>>, vector<64x12xbf16>
    %c0_10 = arith.constant 0 : index
    %c0_11 = arith.constant 0 : index
    %8 = vector.load %arg7[%c0_10, %c0_11] : memref<12x32xbf16, #tpu.memory_space<vmem>>, vector<12x32xbf16>
    %cst_12 = arith.constant dense<0.000000e+00> : vector<64x32xf32>
    %9 = tpu.matmul %7, %8, %cst_12 {dimension_numbers = #tpu.dot_dimension_numbers<[1], [0], [0], [1], [0, 0, 1, 1], [], []>} : vector<64x12xbf16>, vector<12x32xbf16>, vector<64x32xf32> -> vector<64x32xf32>
    %10 = arith.addf %6, %9 : vector<64x32xf32>
    %c0_13 = arith.constant 0 : index
    %c0_14 = arith.constant 0 : index
    %11 = vector.load %arg4[%c0_13, %c0_14] : memref<64x6xbf16, #tpu.memory_space<vmem>>, vector<64x6xbf16>
    %c0_15 = arith.constant 0 : index
    %c0_16 = arith.constant 0 : index
    %12 = vector.load %arg8[%c0_15, %c0_16] : memref<6x32xbf16, #tpu.memory_space<vmem>>, vector<6x32xbf16>
    %cst_17 = arith.constant dense<0.000000e+00> : vector<64x32xf32>
    %13 = tpu.matmul %11, %12, %cst_17 {dimension_numbers = #tpu.dot_dimension_numbers<[1], [0], [0], [1], [0, 0, 1, 1], [], []>} : vector<64x6xbf16>, vector<6x32xbf16>, vector<64x32xf32> -> vector<64x32xf32>
    %14 = arith.addf %10, %13 : vector<64x32xf32>
    %c0_18 = arith.constant 0 : index
    %c0_19 = arith.constant 0 : index
    %15 = vector.load %arg9[%c0_18, %c0_19] : memref<1x32xf32, #tpu.memory_space<vmem>>, vector<1x32xf32>
    %16 = vector.broadcast %15 : vector<1x32xf32> to vector<64x32xf32>
    %17 = arith.addf %14, %16 : vector<64x32xf32>
    %cst_20 = arith.constant 0.000000e+00 : f32
    %18 = vector.broadcast %cst_20 : f32 to vector<64x32xf32>
    %19 = arith.maximumf %17, %18 : vector<64x32xf32>
    %20 = arith.truncf %19 : vector<64x32xf32> to vector<64x32xbf16>
    %c0_21 = arith.constant 0 : index
    %c0_22 = arith.constant 0 : index
    %21 = vector.load %arg10[%c0_21, %c0_22] : memref<32x32xbf16, #tpu.memory_space<vmem>>, vector<32x32xbf16>
    %cst_23 = arith.constant dense<0.000000e+00> : vector<64x32xf32>
    %22 = tpu.matmul %20, %21, %cst_23 {dimension_numbers = #tpu.dot_dimension_numbers<[1], [0], [0], [1], [0, 0, 1, 1], [], []>} : vector<64x32xbf16>, vector<32x32xbf16>, vector<64x32xf32> -> vector<64x32xf32>
    %c0_24 = arith.constant 0 : index
    %c0_25 = arith.constant 0 : index
    %23 = vector.load %arg11[%c0_24, %c0_25] : memref<1x32xf32, #tpu.memory_space<vmem>>, vector<1x32xf32>
    %24 = vector.broadcast %23 : vector<1x32xf32> to vector<64x32xf32>
    %25 = arith.addf %22, %24 : vector<64x32xf32>
    %cst_26 = arith.constant 0.000000e+00 : f32
    %26 = vector.broadcast %cst_26 : f32 to vector<64x32xf32>
    %27 = arith.maximumf %25, %26 : vector<64x32xf32>
    %28 = arith.truncf %27 : vector<64x32xf32> to vector<64x32xbf16>
    %c0_27 = arith.constant 0 : index
    %c0_28 = arith.constant 0 : index
    %29 = vector.load %arg12[%c0_27, %c0_28] : memref<32x1xbf16, #tpu.memory_space<vmem>>, vector<32x1xbf16>
    %cst_29 = arith.constant dense<0.000000e+00> : vector<64x1xf32>
    %30 = tpu.matmul %28, %29, %cst_29 {dimension_numbers = #tpu.dot_dimension_numbers<[1], [0], [0], [1], [0, 0, 1, 1], [], []>} : vector<64x32xbf16>, vector<32x1xbf16>, vector<64x1xf32> -> vector<64x1xf32>
    %c0_30 = arith.constant 0 : index
    %c0_31 = arith.constant 0 : index
    %31 = vector.load %arg13[%c0_30, %c0_31] : memref<1x1xf32, #tpu.memory_space<vmem>>, vector<1x1xf32>
    %32 = vector.broadcast %31 : vector<1x1xf32> to vector<64x1xf32>
    %33 = arith.addf %30, %32 : vector<64x1xf32>
    %cst_32 = arith.constant 0.000000e+00 : f32
    %34 = vector.broadcast %cst_32 : f32 to vector<64x1xf32>
    %35 = arith.subf %34, %33 : vector<64x1xf32>
    %36 = math.exp %35 : vector<64x1xf32>
    %cst_33 = arith.constant 1.000000e+00 : f32
    %37 = vector.broadcast %cst_33 : f32 to vector<64x1xf32>
    %38 = arith.addf %37, %36 : vector<64x1xf32>
    %39 = tpu.reciprocal %38 {approx = true} : vector<64x1xf32> -> vector<64x1xf32>
    %c0_34 = arith.constant 0 : index
    %c0_35 = arith.constant 0 : index
    %40 = vector.load %arg14[%c0_34, %c0_35] : memref<64x1xf32, #tpu.memory_space<vmem>>, vector<64x1xf32>
    tpu.vector_store %arg14[%c0_34, %c0_35], %39 {strides = array<i32>} : memref<64x1xf32, #tpu.memory_space<vmem>>, vector<64x1xf32>,
    return
  }
  func.func @transform_0(%arg0: i32) -> (i32, i32) {
    %c0_i32 = arith.constant 0 : i32
    %c0_i32_0 = arith.constant 0 : i32
    return %arg0, %c0_i32 : i32, i32
  }
  func.func @transform_1(%arg0: i32) -> (i32, i32) {
    %c0_i32 = arith.constant 0 : i32
    %c0_i32_0 = arith.constant 0 : i32
    return %arg0, %c0_i32 : i32, i32
  }
  func.func @transform_2(%arg0: i32) -> (i32, i32) {
    %c0_i32 = arith.constant 0 : i32
    %c0_i32_0 = arith.constant 0 : i32
    return %arg0, %c0_i32 : i32, i32
  }
  func.func @transform_3(%arg0: i32) -> (i32, i32) {
    %c0_i32 = arith.constant 0 : i32
    %c0_i32_0 = arith.constant 0 : i32
    return %arg0, %c0_i32 : i32, i32
  }
  func.func @transform_4(%arg0: i32) -> (i32, i32) {
    %c0_i32 = arith.constant 0 : i32
    %c0_i32_0 = arith.constant 0 : i32
    %c0_i32_1 = arith.constant 0 : i32
    return %c0_i32, %c0_i32_0 : i32, i32
  }
  func.func @transform_5(%arg0: i32) -> (i32, i32) {
    %c0_i32 = arith.constant 0 : i32
    %c0_i32_0 = arith.constant 0 : i32
    %c0_i32_1 = arith.constant 0 : i32
    return %c0_i32, %c0_i32_0 : i32, i32
  }
  func.func @transform_6(%arg0: i32) -> (i32, i32) {
    %c0_i32 = arith.constant 0 : i32
    %c0_i32_0 = arith.constant 0 : i32
    %c0_i32_1 = arith.constant 0 : i32
    return %c0_i32, %c0_i32_0 : i32, i32
  }
  func.func @transform_7(%arg0: i32) -> (i32, i32) {
    %c0_i32 = arith.constant 0 : i32
    %c0_i32_0 = arith.constant 0 : i32
    %c0_i32_1 = arith.constant 0 : i32
    return %c0_i32, %c0_i32_0 : i32, i32
  }
  func.func @transform_8(%arg0: i32) -> (i32, i32) {
    %c0_i32 = arith.constant 0 : i32
    %c0_i32_0 = arith.constant 0 : i32
    %c0_i32_1 = arith.constant 0 : i32
    return %c0_i32, %c0_i32_0 : i32, i32
  }
  func.func @transform_9(%arg0: i32) -> (i32, i32) {
    %c0_i32 = arith.constant 0 : i32
    %c0_i32_0 = arith.constant 0 : i32
    %c0_i32_1 = arith.constant 0 : i32
    return %c0_i32, %c0_i32_0 : i32, i32
  }
  func.func @transform_10(%arg0: i32) -> (i32, i32) {
    %c0_i32 = arith.constant 0 : i32
    %c0_i32_0 = arith.constant 0 : i32
    %c0_i32_1 = arith.constant 0 : i32
    return %c0_i32, %c0_i32_0 : i32, i32
  }
  func.func @transform_11(%arg0: i32) -> (i32, i32) {
    %c0_i32 = arith.constant 0 : i32
    %c0_i32_0 = arith.constant 0 : i32
    %c0_i32_1 = arith.constant 0 : i32
    return %c0_i32, %c0_i32_0 : i32, i32
  }
  func.func @transform_12(%arg0: i32) -> (i32, i32) {
    %c0_i32 = arith.constant 0 : i32
    %c0_i32_0 = arith.constant 0 : i32
    %c0_i32_1 = arith.constant 0 : i32
    return %c0_i32, %c0_i32_0 : i32, i32
  }
  func.func @transform_13(%arg0: i32) -> (i32, i32) {
    %c0_i32 = arith.constant 0 : i32
    %c0_i32_0 = arith.constant 0 : i32
    return %arg0, %c0_i32 : i32, i32
  }
}

</mosaic_0001>

<llo_original>
// kernel: tpu_custom_call.1
$region0: #{tpu_custom_call.1}
  #allocation0 [shape = 'u32[]', space=smem, size = 0x4, offset = 0x4, fixed_abs, tag = 'smem constant byte address 0x4 - core index']
  #allocation1 [shape = 'u32[144,128]{1,0:T(1,128)}', space=vmem, size = 0x12000, scoped, tag = 'internal scratch']
  #allocation2 [shape = 'f32[1,1]{1,0:T(1,128)S(1)}', space=vmem, size = 0x200, scoped, tag = 'scoped memory for tpu_custom_call.1']
  %s0 = inlined_call_operand.vmem [shape: bf16[256,4], index: 0, kind: input, shape index: {}]
  %s1 = inlined_call_operand.vmem [shape: bf16[256,32], index: 1, kind: input, shape index: {}]
  %s2 = inlined_call_operand.vmem [shape: bf16[256,12], index: 2, kind: input, shape index: {}]
  %s3 = inlined_call_operand.vmem [shape: bf16[256,6], index: 3, kind: input, shape index: {}]
  %s4 = inlined_call_operand.vmem [shape: bf16[4,32], index: 4, kind: input, shape index: {}]
  %s5 = inlined_call_operand.vmem [shape: bf16[32,32], index: 5, kind: input, shape index: {}]
  %s6 = inlined_call_operand.vmem [shape: bf16[12,32], index: 6, kind: input, shape index: {}]
  %s7 = inlined_call_operand.vmem [shape: bf16[6,32], index: 7, kind: input, shape index: {}]
  %s8 = inlined_call_operand.vmem [shape: f32[1,32], index: 8, kind: input, shape index: {}]
  %s9 = inlined_call_operand.vmem [shape: bf16[32,32], index: 9, kind: input, shape index: {}]
  %s10 = inlined_call_operand.vmem [shape: f32[1,32], index: 10, kind: input, shape index: {}]
  %s11 = inlined_call_operand.vmem [shape: bf16[32,1], index: 11, kind: input, shape index: {}]
  %s12 = inlined_call_operand.<no memory space> [shape: f32[1,1], index: 12, kind: input, shape index: {}]
  %s13 = inlined_call_operand.vmem [shape: f32[256,1], index: 13, kind: output, shape index: {}]
  %s14 = sld [smem:[#allocation0]]
  $region85: #{tpu_custom_call.1} parent=0
    _
  %s16 = ssub.s32 1, %s14
  %s17 = scalar_select 0, %s16, %s14
  %v18 = vstv %s12
  %19 = vst [vmem:[#allocation2] sm:$0x1] %v18
  loop: start=0, step=1, limit=6
  $region2: #{tpu_custom_call.1} parent=0 // loop_pre_header
    _
  $region3: #{tpu_custom_call.1} parent=0 // loop_header
    %s21 = sphi 0, %s25
    %p22 = scmp.ge.s32.totalorder %s21, 6
    %s31 = sphi 0, %s33
    %s34 = sphi 0, %s31
    %s35 = sphi 0, %s34
    %s51 = sphi 0, %s35
    %s57 = sphi 0, %s59
    %s60 = sphi 0, %s57
    %s61 = sphi 0, %s60
    %s77 = sphi 0, %s61
    %s83 = sphi 0, %s85
    %s86 = sphi 0, %s83
    %s87 = sphi 0, %s86
    %s103 = sphi 0, %s87
    %s109 = sphi 0, %s111
    %s112 = sphi 0, %s109
    %s113 = sphi 0, %s112
    %s129 = sphi 0, %s113
    %s133 = sphi 0, %s133
    %s135 = sphi 0, %s133
    %s136 = sphi 0, %s135
    %s150 = sphi 0, %s136
    %s154 = sphi 0, %s154
    %s156 = sphi 0, %s154
    %s157 = sphi 0, %s156
    %s171 = sphi 0, %s157
    %s175 = sphi 0, %s175
    %s177 = sphi 0, %s175
    %s178 = sphi 0, %s177
    %s192 = sphi 0, %s178
    %s196 = sphi 0, %s196
    %s198 = sphi 0, %s196
    %s199 = sphi 0, %s198
    %s213 = sphi 0, %s199
    %s217 = sphi 0, %s217
    %s219 = sphi 0, %s217
    %s220 = sphi 0, %s219
    %s234 = sphi 0, %s220
    %s238 = sphi 0, %s238
    %s240 = sphi 0, %s238
    %s241 = sphi 0, %s240
    %s255 = sphi 0, %s241
    %s259 = sphi 0, %s259
    %s261 = sphi 0, %s259
    %s262 = sphi 0, %s261
    %s276 = sphi 0, %s262
    %s280 = sphi 0, %s280
    %s282 = sphi 0, %s280
    %s283 = sphi 0, %s282
    %s297 = sphi 0, %s283
    %s301 = sphi 0, %s301
    %s303 = sphi 0, %s301
    %s304 = sphi 0, %s303
    %s318 = sphi 0, %s304
    %s324 = sphi 0, %s326
    %s327 = sphi 0, %s324
    %s328 = sphi 0, %s327
    %s344 = sphi 0, %s328
  $region4: #{tpu_custom_call.1} parent=0 // loop_header_branch
    %24 = sbr.rel (%p22) target = $region8
  $region5: #{tpu_custom_call.1} parent=0 // loop_body
    %s26 = ssub.s32 %s21, 1
    %s27 = ssub.s32 %s21, 2
    %s28 = sadd.s32 %s21, 1
    %s29 = ssub.s32 %s21, %s28
    %p30 = scmp.eq.s32.totalorder %s29, 0
    %s32 = sadd.s32 %s31, 1
    %s33 = scalar_select %p30, %s31, %s32
    %p36 = pneg %p30
    %p37 = scmp.eq.s32.totalorder %s21, 3
    %p38 = por %p36, %p37
    %p39 = scmp.ne.s32.totalorder %s31, %s34
    %p40 = scmp.eq.s32.totalorder %s21, 0
    %p41 = por %p39, %p40
    %p42 = scmp.ne.s32.totalorder %s31, %s34
    %p43 = scmp.eq.s32.totalorder %s26, 3
    %p44 = por %p42, %p43
    %p45 = scmp.ne.s32.totalorder %s34, %s35
    %p46 = scmp.eq.s32.totalorder %s26, 0
    %p47 = por %p45, %p46
    %p48 = scmp.ne.s32.totalorder %s34, %s35
    %p49 = scmp.eq.s32.totalorder %s27, 3
    %p50 = por %p48, %p49
    %p52 = scmp.ne.s32.totalorder %s35, %s51
    %p53 = scmp.eq.s32.totalorder %s27, 0
    %p54 = por %p52, %p53
    %s55 = ssub.s32 %s21, %s28
    %p56 = scmp.eq.s32.totalorder %s55, 0
    %s58 = sadd.s32 %s57, 1
    %s59 = scalar_select %p56, %s57, %s58
    %p62 = pneg %p56
    %p63 = scmp.eq.s32.totalorder %s21, 3
    %p64 = por %p62, %p63
    %p65 = scmp.ne.s32.totalorder %s57, %s60
    %p66 = scmp.eq.s32.totalorder %s21, 0
    %p67 = por %p65, %p66
    %p68 = scmp.ne.s32.totalorder %s57, %s60
    %p69 = scmp.eq.s32.totalorder %s26, 3
    %p70 = por %p68, %p69
    %p71 = scmp.ne.s32.totalorder %s60, %s61
    %p72 = scmp.eq.s32.totalorder %s26, 0
    %p73 = por %p71, %p72
    %p74 = scmp.ne.s32.totalorder %s60, %s61
    %p75 = scmp.eq.s32.totalorder %s27, 3
    %p76 = por %p74, %p75
    %p78 = scmp.ne.s32.totalorder %s61, %s77
    %p79 = scmp.eq.s32.totalorder %s27, 0
    %p80 = por %p78, %p79
    %s81 = ssub.s32 %s21, %s28
    %p82 = scmp.eq.s32.totalorder %s81, 0
    %s84 = sadd.s32 %s83, 1
    %s85 = scalar_select %p82, %s83, %s84
    %p88 = pneg %p82
    %p89 = scmp.eq.s32.totalorder %s21, 3
    %p90 = por %p88, %p89
    %p91 = scmp.ne.s32.totalorder %s83, %s86
    %p92 = scmp.eq.s32.totalorder %s21, 0
    %p93 = por %p91, %p92
    %p94 = scmp.ne.s32.totalorder %s83, %s86
    %p95 = scmp.eq.s32.totalorder %s26, 3
    %p96 = por %p94, %p95
    %p97 = scmp.ne.s32.totalorder %s86, %s87
    %p98 = scmp.eq.s32.totalorder %s26, 0
    %p99 = por %p97, %p98
    %p100 = scmp.ne.s32.totalorder %s86, %s87
    %p101 = scmp.eq.s32.totalorder %s27, 3
    %p102 = por %p100, %p101
    %p104 = scmp.ne.s32.totalorder %s87, %s103
    %p105 = scmp.eq.s32.totalorder %s27, 0
    %p106 = por %p104, %p105
    %s107 = ssub.s32 %s21, %s28
    %p108 = scmp.eq.s32.totalorder %s107, 0
    %s110 = sadd.s32 %s109, 1
    %s111 = scalar_select %p108, %s109, %s110
    %p114 = pneg %p108
    %p115 = scmp.eq.s32.totalorder %s21, 3
    %p116 = por %p114, %p115
    %p117 = scmp.ne.s32.totalorder %s109, %s112
    %p118 = scmp.eq.s32.totalorder %s21, 0
    %p119 = por %p117, %p118
    %p120 = scmp.ne.s32.totalorder %s109, %s112
    %p121 = scmp.eq.s32.totalorder %s26, 3
    %p122 = por %p120, %p121
    %p123 = scmp.ne.s32.totalorder %s112, %s113
    %p124 = scmp.eq.s32.totalorder %s26, 0
    %p125 = por %p123, %p124
    %p126 = scmp.ne.s32.totalorder %s112, %s113
    %p127 = scmp.eq.s32.totalorder %s27, 3
    %p128 = por %p126, %p127
    %p130 = scmp.ne.s32.totalorder %s113, %s129
    %p131 = scmp.eq.s32.totalorder %s27, 0
    %p132 = por %p130, %p131
    %s134 = sadd.s32 %s133, 1
    %p137 = scmp.eq.s32.totalorder %s21, 3
    %p138 = scmp.ne.s32.totalorder %s133, %s135
    %p139 = scmp.eq.s32.totalorder %s21, 0
    %p140 = por %p138, %p139
    %p141 = scmp.ne.s32.totalorder %s133, %s135
    %p142 = scmp.eq.s32.totalorder %s26, 3
    %p143 = por %p141, %p142
    %p144 = scmp.ne.s32.totalorder %s135, %s136
    %p145 = scmp.eq.s32.totalorder %s26, 0
    %p146 = por %p144, %p145
    %p147 = scmp.ne.s32.totalorder %s135, %s136
    %p148 = scmp.eq.s32.totalorder %s27, 3
    %p149 = por %p147, %p148
    %p151 = scmp.ne.s32.totalorder %s136, %s150
    %p152 = scmp.eq.s32.totalorder %s27, 0
    %p153 = por %p151, %p152
    %s155 = sadd.s32 %s154, 1
    %p158 = scmp.eq.s32.totalorder %s21, 3
    %p159 = scmp.ne.s32.totalorder %s154, %s156
    %p160 = scmp.eq.s32.totalorder %s21, 0
    %p161 = por %p159, %p160
    %p162 = scmp.ne.s32.totalorder %s154, %s156
    %p163 = scmp.eq.s32.totalorder %s26, 3
    %p164 = por %p162, %p163
    %p165 = scmp.ne.s32.totalorder %s156, %s157
    %p166 = scmp.eq.s32.totalorder %s26, 0
    %p167 = por %p165, %p166
    %p168 = scmp.ne.s32.totalorder %s156, %s157
    %p169 = scmp.eq.s32.totalorder %s27, 3
    %p170 = por %p168, %p169
    %p172 = scmp.ne.s32.totalorder %s157, %s171
    %p173 = scmp.eq.s32.totalorder %s27, 0
    %p174 = por %p172, %p173
    %s176 = sadd.s32 %s175, 1
    %p179 = scmp.eq.s32.totalorder %s21, 3
    %p180 = scmp.ne.s32.totalorder %s175, %s177
    %p181 = scmp.eq.s32.totalorder %s21, 0
    %p182 = por %p180, %p181
    %p183 = scmp.ne.s32.totalorder %s175, %s177
    %p184 = scmp.eq.s32.totalorder %s26, 3
    %p185 = por %p183, %p184
    %p186 = scmp.ne.s32.totalorder %s177, %s178
    %p187 = scmp.eq.s32.totalorder %s26, 0
    %p188 = por %p186, %p187
    %p189 = scmp.ne.s32.totalorder %s177, %s178
    %p190 = scmp.eq.s32.totalorder %s27, 3
    %p191 = por %p189, %p190
    %p193 = scmp.ne.s32.totalorder %s178, %s192
    %p194 = scmp.eq.s32.totalorder %s27, 0
    %p195 = por %p193, %p194
    %s197 = sadd.s32 %s196, 1
    %p200 = scmp.eq.s32.totalorder %s21, 3
    %p201 = scmp.ne.s32.totalorder %s196, %s198
    %p202 = scmp.eq.s32.totalorder %s21, 0
    %p203 = por %p201, %p202
    %p204 = scmp.ne.s32.totalorder %s196, %s198
    %p205 = scmp.eq.s32.totalorder %s26, 3
    %p206 = por %p204, %p205
    %p207 = scmp.ne.s32.totalorder %s198, %s199
    %p208 = scmp.eq.s32.totalorder %s26, 0
    %p209 = por %p207, %p208
    %p210 = scmp.ne.s32.totalorder %s198, %s199
    %p211 = scmp.eq.s32.totalorder %s27, 3
    %p212 = por %p210, %p211
    %p214 = scmp.ne.s32.totalorder %s199, %s213
    %p215 = scmp.eq.s32.totalorder %s27, 0
    %p216 = por %p214, %p215
    %s218 = sadd.s32 %s217, 1
    %p221 = scmp.eq.s32.totalorder %s21, 3
    %p222 = scmp.ne.s32.totalorder %s217, %s219
    %p223 = scmp.eq.s32.totalorder %s21, 0
    %p224 = por %p222, %p223
    %p225 = scmp.ne.s32.totalorder %s217, %s219
    %p226 = scmp.eq.s32.totalorder %s26, 3
    %p227 = por %p225, %p226
    %p228 = scmp.ne.s32.totalorder %s219, %s220
    %p229 = scmp.eq.s32.totalorder %s26, 0
    %p230 = por %p228, %p229
    %p231 = scmp.ne.s32.totalorder %s219, %s220
    %p232 = scmp.eq.s32.totalorder %s27, 3
    %p233 = por %p231, %p232
    %p235 = scmp.ne.s32.totalorder %s220, %s234
    %p236 = scmp.eq.s32.totalorder %s27, 0
    %p237 = por %p235, %p236
    %s239 = sadd.s32 %s238, 1
    %p242 = scmp.eq.s32.totalorder %s21, 3
    %p243 = scmp.ne.s32.totalorder %s238, %s240
    %p244 = scmp.eq.s32.totalorder %s21, 0
    %p245 = por %p243, %p244
    %p246 = scmp.ne.s32.totalorder %s238, %s240
    %p247 = scmp.eq.s32.totalorder %s26, 3
    %p248 = por %p246, %p247
    %p249 = scmp.ne.s32.totalorder %s240, %s241
    %p250 = scmp.eq.s32.totalorder %s26, 0
    %p251 = por %p249, %p250
    %p252 = scmp.ne.s32.totalorder %s240, %s241
    %p253 = scmp.eq.s32.totalorder %s27, 3
    %p254 = por %p252, %p253
    %p256 = scmp.ne.s32.totalorder %s241, %s255
    %p257 = scmp.eq.s32.totalorder %s27, 0
    %p258 = por %p256, %p257
    %s260 = sadd.s32 %s259, 1
    %p263 = scmp.eq.s32.totalorder %s21, 3
    %p264 = scmp.ne.s32.totalorder %s259, %s261
    %p265 = scmp.eq.s32.totalorder %s21, 0
    %p266 = por %p264, %p265
    %p267 = scmp.ne.s32.totalorder %s259, %s261
    %p268 = scmp.eq.s32.totalorder %s26, 3
    %p269 = por %p267, %p268
    %p270 = scmp.ne.s32.totalorder %s261, %s262
    %p271 = scmp.eq.s32.totalorder %s26, 0
    %p272 = por %p270, %p271
    %p273 = scmp.ne.s32.totalorder %s261, %s262
    %p274 = scmp.eq.s32.totalorder %s27, 3
    %p275 = por %p273, %p274
    %p277 = scmp.ne.s32.totalorder %s262, %s276
    %p278 = scmp.eq.s32.totalorder %s27, 0
    %p279 = por %p277, %p278
    %s281 = sadd.s32 %s280, 1
    %p284 = scmp.eq.s32.totalorder %s21, 3
    %p285 = scmp.ne.s32.totalorder %s280, %s282
    %p286 = scmp.eq.s32.totalorder %s21, 0
    %p287 = por %p285, %p286
    %p288 = scmp.ne.s32.totalorder %s280, %s282
    %p289 = scmp.eq.s32.totalorder %s26, 3
    %p290 = por %p288, %p289
    %p291 = scmp.ne.s32.totalorder %s282, %s283
    %p292 = scmp.eq.s32.totalorder %s26, 0
    %p293 = por %p291, %p292
    %p294 = scmp.ne.s32.totalorder %s282, %s283
    %p295 = scmp.eq.s32.totalorder %s27, 3
    %p296 = por %p294, %p295
    %p298 = scmp.ne.s32.totalorder %s283, %s297
    %p299 = scmp.eq.s32.totalorder %s27, 0
    %p300 = por %p298, %p299
    %s302 = sadd.s32 %s301, 1
    %p305 = scmp.eq.s32.totalorder %s21, 3
    %p306 = scmp.ne.s32.totalorder %s301, %s303
    %p307 = scmp.eq.s32.totalorder %s21, 0
    %p308 = por %p306, %p307
    %p309 = scmp.ne.s32.totalorder %s301, %s303
    %p310 = scmp.eq.s32.totalorder %s26, 3
    %p311 = por %p309, %p310
    %p312 = scmp.ne.s32.totalorder %s303, %s304
    %p313 = scmp.eq.s32.totalorder %s26, 0
    %p314 = por %p312, %p313
    %p315 = scmp.ne.s32.totalorder %s303, %s304
    %p316 = scmp.eq.s32.totalorder %s27, 3
    %p317 = por %p315, %p316
    %p319 = scmp.ne.s32.totalorder %s304, %s318
    %p320 = scmp.eq.s32.totalorder %s27, 0
    %p321 = por %p319, %p320
    %s322 = ssub.s32 %s21, %s28
    %p323 = scmp.eq.s32.totalorder %s322, 0
    %s325 = sadd.s32 %s324, 1
    %s326 = scalar_select %p323, %s324, %s325
    %p329 = pneg %p323
    %p330 = scmp.eq.s32.totalorder %s21, 3
    %p331 = por %p329, %p330
    %p332 = scmp.ne.s32.totalorder %s324, %s327
    %p333 = scmp.eq.s32.totalorder %s21, 0
    %p334 = por %p332, %p333
    %p335 = scmp.ne.s32.totalorder %s324, %s327
    %p336 = scmp.eq.s32.totalorder %s26, 3
    %p337 = por %p335, %p336
    %p338 = scmp.ne.s32.totalorder %s327, %s328
    %p339 = scmp.eq.s32.totalorder %s26, 0
    %p340 = por %p338, %p339
    %p341 = scmp.ne.s32.totalorder %s327, %s328
    %p342 = scmp.eq.s32.totalorder %s27, 3
    %p343 = por %p341, %p342
    %p345 = scmp.ne.s32.totalorder %s328, %s344
    %p346 = scmp.eq.s32.totalorder %s27, 0
    %p347 = por %p345, %p346
    %p348 = scmp.le.s32.totalorder 1, %s21
    %p349 = scmp.lt.s32.totalorder %s21, 5
    %p350 = pnand %p348, %p349
    %p351 = pneg %p350
    // Predicated region
    $region9: #{tpu_custom_call.1} parent=5 // pred_check
      _
    $region10: #{tpu_custom_call.1} parent=5 // pred_check_branch
      %353 = sbr.rel (%p350) target = $region12
    $region11: #{tpu_custom_call.1} parent=5 // pred_region
      %s354 = ssub.s32 %s21, 1
      // Predicated region
      $region13: #{tpu_custom_call.1} parent=11 // pred_check
        %p355 = pneg %p146
      $region14: #{tpu_custom_call.1} parent=11 // pred_check_branch
        %357 = sbr.rel (%p355) target = $region16
      $region15: #{tpu_custom_call.1} parent=11 // pred_region
        _
      $region16: #{tpu_custom_call.1} parent=11 // pred_fallthru
        _
      // Predicated region
      $region17: #{tpu_custom_call.1} parent=11 // pred_check
        %p358 = pneg %p167
      $region18: #{tpu_custom_call.1} parent=11 // pred_check_branch
        %360 = sbr.rel (%p358) target = $region20
      $region19: #{tpu_custom_call.1} parent=11 // pred_region
        _
      $region20: #{tpu_custom_call.1} parent=11 // pred_fallthru
        _
      // Predicated region
      $region21: #{tpu_custom_call.1} parent=11 // pred_check
        %p361 = pneg %p188
      $region22: #{tpu_custom_call.1} parent=11 // pred_check_branch
        %363 = sbr.rel (%p361) target = $region24
      $region23: #{tpu_custom_call.1} parent=11 // pred_region
        _
      $region24: #{tpu_custom_call.1} parent=11 // pred_fallthru
        _
      // Predicated region
      $region25: #{tpu_custom_call.1} parent=11 // pred_check
        %p364 = pneg %p209
      $region26: #{tpu_custom_call.1} parent=11 // pred_check_branch
        %366 = sbr.rel (%p364) target = $region28
      $region27: #{tpu_custom_call.1} parent=11 // pred_region
        _
      $region28: #{tpu_custom_call.1} parent=11 // pred_fallthru
        _
      // Predicated region
      $region29: #{tpu_custom_call.1} parent=11 // pred_check
        %p367 = pneg %p230
      $region30: #{tpu_custom_call.1} parent=11 // pred_check_branch
        %369 = sbr.rel (%p367) target = $region32
      $region31: #{tpu_custom_call.1} parent=11 // pred_region
        _
      $region32: #{tpu_custom_call.1} parent=11 // pred_fallthru
        _
      // Predicated region
      $region33: #{tpu_custom_call.1} parent=11 // pred_check
        %p370 = pneg %p251
      $region34: #{tpu_custom_call.1} parent=11 // pred_check_branch
        %372 = sbr.rel (%p370) target = $region36
      $region35: #{tpu_custom_call.1} parent=11 // pred_region
        _
      $region36: #{tpu_custom_call.1} parent=11 // pred_fallthru
        _
      // Predicated region
      $region37: #{tpu_custom_call.1} parent=11 // pred_check
        %p373 = pneg %p272
      $region38: #{tpu_custom_call.1} parent=11 // pred_check_branch
        %375 = sbr.rel (%p373) target = $region40
      $region39: #{tpu_custom_call.1} parent=11 // pred_region
        _
      $region40: #{tpu_custom_call.1} parent=11 // pred_fallthru
        _
      // Predicated region
      $region41: #{tpu_custom_call.1} parent=11 // pred_check
        %p376 = pneg %p293
      $region42: #{tpu_custom_call.1} parent=11 // pred_check_branch
        %378 = sbr.rel (%p376) target = $region44
      $region43: #{tpu_custom_call.1} parent=11 // pred_region
        _
      $region44: #{tpu_custom_call.1} parent=11 // pred_fallthru
        _
      // Predicated region
      $region45: #{tpu_custom_call.1} parent=11 // pred_check
        %p379 = pneg %p314
      $region46: #{tpu_custom_call.1} parent=11 // pred_check_branch
        %381 = sbr.rel (%p379) target = $region48
      $region47: #{tpu_custom_call.1} parent=11 // pred_region
        _
      $region48: #{tpu_custom_call.1} parent=11 // pred_fallthru
        _
    $region12: #{tpu_custom_call.1} parent=5 // pred_fallthru
      _
    %p382 = scmp.lt.s32.totalorder %s21, 4
    // Predicated region
    $region49: #{tpu_custom_call.1} parent=5 // pred_check
      %p383 = pneg %p382
    $region50: #{tpu_custom_call.1} parent=5 // pred_check_branch
      %385 = sbr.rel (%p383) target = $region52
    $region51: #{tpu_custom_call.1} parent=5 // pred_region
      // Predicated region
      $region53: #{tpu_custom_call.1} parent=51 // pred_check
        %p386 = pneg %p41
      $region54: #{tpu_custom_call.1} parent=51 // pred_check_branch
        %388 = sbr.rel (%p386) target = $region56
      $region55: #{tpu_custom_call.1} parent=51 // pred_region
        %s389 = smul.u32 8, %s21
        %p390 = scmp.lt.s32.totalorder %s389, 31
        %s391 = scalar_select %p390, %s389, 31
        %s392 = smul.addr %s391, 4
        %s393 = scalar_lea.vmem %s0, %s392
        %s394 = smul.u32 8, %s21
      $region56: #{tpu_custom_call.1} parent=51 // pred_fallthru
        _
      // Predicated region
      $region57: #{tpu_custom_call.1} parent=51 // pred_check
        %p395 = pneg %p67
      $region58: #{tpu_custom_call.1} parent=51 // pred_check_branch
        %397 = sbr.rel (%p395) target = $region60
      $region59: #{tpu_custom_call.1} parent=51 // pred_region
        %s398 = smul.u32 8, %s21
        %p399 = scmp.lt.s32.totalorder %s398, 31
        %s400 = scalar_select %p399, %s398, 31
        %s401 = smul.addr %s400, 4
        %s402 = scalar_lea.vmem %s1, %s401
        %s403 = smul.u32 8, %s21
      $region60: #{tpu_custom_call.1} parent=51 // pred_fallthru
        _
      // Predicated region
      $region61: #{tpu_custom_call.1} parent=51 // pred_check
        %p404 = pneg %p93
      $region62: #{tpu_custom_call.1} parent=51 // pred_check_branch
        %406 = sbr.rel (%p404) target = $region64
      $region63: #{tpu_custom_call.1} parent=51 // pred_region
        %s407 = smul.u32 8, %s21
        %p408 = scmp.lt.s32.totalorder %s407, 31
        %s409 = scalar_select %p408, %s407, 31
        %s410 = smul.addr %s409, 4
        %s411 = scalar_lea.vmem %s2, %s410
        %s412 = smul.u32 8, %s21
      $region64: #{tpu_custom_call.1} parent=51 // pred_fallthru
        _
      // Predicated region
      $region65: #{tpu_custom_call.1} parent=51 // pred_check
        %p413 = pneg %p119
      $region66: #{tpu_custom_call.1} parent=51 // pred_check_branch
        %415 = sbr.rel (%p413) target = $region68
      $region67: #{tpu_custom_call.1} parent=51 // pred_region
        %s416 = smul.u32 8, %s21
        %p417 = scmp.lt.s32.totalorder %s416, 31
        %s418 = scalar_select %p417, %s416, 31
        %s419 = smul.addr %s418, 4
        %s420 = scalar_lea.vmem %s3, %s419
        %s421 = smul.u32 8, %s21
      $region68: #{tpu_custom_call.1} parent=51 // pred_fallthru
        _
    $region52: #{tpu_custom_call.1} parent=5 // pred_fallthru
      _
    %p422 = scmp.le.s32.totalorder 1, %s21
    %p423 = scmp.lt.s32.totalorder %s21, 5
    %p424 = pnand %p422, %p423
    %p425 = pneg %p424
    // Predicated region
    $region69: #{tpu_custom_call.1} parent=5 // pred_check
      _
    $region70: #{tpu_custom_call.1} parent=5 // pred_check_branch
      %427 = sbr.rel (%p424) target = $region72
    $region71: #{tpu_custom_call.1} parent=5 // pred_region
      %s428 = ssub.s32 %s21, 1
      %s429 = smul.u32 8, %s26
      %p430 = scmp.lt.s32.totalorder %s429, 31
      %s431 = scalar_select %p430, %s429, 31
      %s432 = smul.addr %s431, 4
      %s433 = scalar_lea.vmem %s0, %s432
      %p434 = pneg %p47
      %p435 = pneg %p44
      %s436 = smul.u32 8, %s26
      %p437 = scmp.lt.s32.totalorder %s436, 31
      %s438 = scalar_select %p437, %s436, 31
      %s439 = smul.addr %s438, 4
      %s440 = scalar_lea.vmem %s1, %s439
      %p441 = pneg %p73
      %p442 = pneg %p70
      %s443 = smul.u32 8, %s26
      %p444 = scmp.lt.s32.totalorder %s443, 31
      %s445 = scalar_select %p444, %s443, 31
      %s446 = smul.addr %s445, 4
      %s447 = scalar_lea.vmem %s2, %s446
      %p448 = pneg %p99
      %p449 = pneg %p96
      %s450 = smul.u32 8, %s26
      %p451 = scmp.lt.s32.totalorder %s450, 31
      %s452 = scalar_select %p451, %s450, 31
      %s453 = smul.addr %s452, 4
      %s454 = scalar_lea.vmem %s3, %s453
      %p455 = pneg %p125
      %p456 = pneg %p122
      %p457 = pneg %p146
      %p458 = pneg %p143
      %p459 = pneg %p167
      %p460 = pneg %p164
      %p461 = pneg %p188
      %p462 = pneg %p185
      %p463 = pneg %p209
      %p464 = pneg %p206
      %p465 = pneg %p230
      %p466 = pneg %p227
      %p467 = pneg %p251
      %p468 = pneg %p248
      %p469 = pneg %p272
      %p470 = pneg %p269
      %p471 = pneg %p293
      %p472 = pneg %p290
      %p473 = pneg %p314
      %p474 = pneg %p311
      %p475 = pneg %p340
      %p476 = pneg %p337
      %s477 = smul.u32 8, %s26
      %p478 = scmp.lt.s32.totalorder %s477, 31
      %s479 = scalar_select %p478, %s477, 31
      %s480 = smul.addr %s479, 8
      %s481 = scalar_lea.vmem %s13, %s480
      %s482 = smul.u32 8, %s26
      %p483 = scmp.lt.s32.totalorder %s482, 31
      %s484 = scalar_select %p483, %s482, 31
      %s485 = smul.addr %s484, 4
      %s486 = scalar_lea.vmem %s0, %s485
      %s487 = smul.u32 8, %s26
      %s488 = smul.u32 8, %s26
      %p489 = scmp.lt.s32.totalorder %s488, 31
      %s490 = scalar_select %p489, %s488, 31
      %s491 = smul.addr %s490, 4
      %s492 = scalar_lea.vmem %s1, %s491
      %s493 = smul.u32 8, %s26
      %s494 = smul.u32 8, %s26
      %p495 = scmp.lt.s32.totalorder %s494, 31
      %s496 = scalar_select %p495, %s494, 31
      %s497 = smul.addr %s496, 4
      %s498 = scalar_lea.vmem %s2, %s497
      %s499 = smul.u32 8, %s26
      %s500 = smul.u32 8, %s26
      %p501 = scmp.lt.s32.totalorder %s500, 31
      %s502 = scalar_select %p501, %s500, 31
      %s503 = smul.addr %s502, 4
      %s504 = scalar_lea.vmem %s3, %s503
      %s505 = smul.u32 8, %s26
      %s506 = smul.u32 8, %s26
      %p507 = scmp.lt.s32.totalorder %s506, 31
      %s508 = scalar_select %p507, %s506, 31
      %s509 = smul.addr %s508, 8
      %s510 = scalar_lea.vmem %s13, %s509
      %s511 = smul.u32 8, %s26
      %v513 = vld [vmem:[%s486] sm:$0xf]
      %v514 = vld [vmem:[%s486 + $0x4] sm:$0xf]
      %v515 = vld [vmem:[%s486 + $0x8] sm:$0xf]
      %v516 = vld [vmem:[%s486 + $0xc] sm:$0xf]
      %v517 = vld [vmem:[%s486 + $0x10] sm:$0xf]
      %v518 = vld [vmem:[%s486 + $0x14] sm:$0xf]
      %v519 = vld [vmem:[%s486 + $0x18] sm:$0xf]
      %v520 = vld [vmem:[%s486 + $0x1c] sm:$0xf]
      %v521 = vld [vmem:[%s4] sm:$0x3]
      %v522 = vld [vmem:[%s492] sm:$0xf]
      %v523 = vld [vmem:[%s492 + $0x4] sm:$0xf]
      %v524 = vld [vmem:[%s492 + $0x8] sm:$0xf]
      %v525 = vld [vmem:[%s492 + $0xc] sm:$0xf]
      %v526 = vld [vmem:[%s492 + $0x10] sm:$0xf]
      %v527 = vld [vmem:[%s492 + $0x14] sm:$0xf]
      %v528 = vld [vmem:[%s492 + $0x18] sm:$0xf]
      %v529 = vld [vmem:[%s492 + $0x1c] sm:$0xf]
      %v530 = vld [vmem:[%s5] sm:$0xf]
      %v531 = vld [vmem:[%s5 + $0x4] sm:$0xf]
      %v532 = vld [vmem:[%s5 + $0x8] sm:$0xf]
      %v533 = vld [vmem:[%s5 + $0xc] sm:$0xf]
      %v542 = vunpack.c.l.b16 %v522
      %v543 = vunpack.c.l.b16 %v523
      %v544 = vunpack.c.l.b16 %v524
      %v545 = vunpack.c.l.b16 %v525
      %v546 = vunpack.c.l.b16 %v526
      %v547 = vunpack.c.l.b16 %v527
      %v548 = vunpack.c.l.b16 %v528
      %v549 = vunpack.c.l.b16 %v529
      %v550 = vpack.c.b16 %v543, %v542
      %v551 = vpack.c.b16 %v545, %v544
      %v552 = vpack.c.b16 %v547, %v546
      %v553 = vpack.c.b16 %v549, %v548
      %v558 = vunpack.c.l.b16 %v530
      %v559 = vunpack.c.l.b16 %v531
      %v560 = vunpack.c.l.b16 %v532
      %v561 = vunpack.c.l.b16 %v533
      %v562 = vpack.c.b16 %v559, %v558
      %v563 = vpack.c.b16 %v561, %v560
      %vm566 = vcmask 261120
      %v568 = vsel %vm566, %v550, 0
      %v571 = vsel %vm566, %v551, 0
      %v574 = vsel %vm566, %v552, 0
      %v577 = vsel %vm566, %v553, 0
      %579 = vmatprep.subr.bf16.mxu0 0
      %580 = vmatpush1.bf16.msra.mxu0 0
      %581 = vmatprep.subr.bf16.mxu0 0
      %582 = vmatpush1.bf16.msra.mxu0 0
      %583 = vmatprep.subr.bf16.mxu0 0
      %584 = vmatpush1.bf16.msra.mxu0 0
      %585 = vmatprep.subr.bf16.mxu0 0
      %586 = vmatpush1.bf16.msra.mxu0 0
      %587 = vmatprep.subr.bf16.mxu0 0
      %588 = vmatpush1.bf16.msra.mxu0 0
      %589 = vmatprep.subr.bf16.mxu0 0
      %590 = vmatpush1.bf16.msra.mxu0 0
      %591 = vmatprep.subr.bf16.mxu0 0
      %592 = vmatpush1.bf16.msra.mxu0 %v563
      %593 = vmatprep.subr.bf16.mxu0 0
      %594 = vmatpush1.bf16.msra.mxu0 %v562
      %595 = vmatprep.subr.bf16.mxu0 0
      %596 = vmatpush2.bf16.msra.mxu0 0
      %597 = vmatprep.subr.bf16.mxu0 0
      %598 = vmatpush2.bf16.msra.mxu0 0
      %599 = vmatprep.subr.bf16.mxu0 0
      %600 = vmatpush2.bf16.msra.mxu0 0
      %601 = vmatprep.subr.bf16.mxu0 0
      %602 = vmatpush2.bf16.msra.mxu0 0
      %603 = vmatprep.subr.bf16.mxu0 0
      %604 = vmatpush2.bf16.msra.mxu0 0
      %605 = vmatprep.subr.bf16.mxu0 0
      %606 = vmatpush2.bf16.msra.mxu0 0
      %607 = vmatprep.subr.bf16.mxu0 0
      %608 = vmatpush2.bf16.msra.mxu0 0
      %609 = vmatprep.subr.bf16.mxu0 0
      %610 = vmatpush2.bf16.msra.mxu0 0
      %611 = vmatprep.mubr.bf16.mxu0 0
      %612 = vmatmul.mubr.bf16.gmra.mxu0 %v568
      %v613 = vpop.f32.mrf.mxu0
      %v614 = vadd.f32 0.0, %v613
      %v615 = vpop.f32.mrf.mxu0
      %v616 = vpop.f32.mrf.mxu0
      %v617 = vadd.f32 0.0, %v616
      %v618 = vpop.f32.mrf.mxu0
      %619 = vmatprep.mubr.bf16.mxu0 0
      %620 = vmatmul.mubr.bf16.gmra.mxu0 %v571
      %v621 = vpop.f32.mrf.mxu0
      %v622 = vadd.f32 0.0, %v621
      %v623 = vpop.f32.mrf.mxu0
      %v624 = vpop.f32.mrf.mxu0
      %v625 = vadd.f32 0.0, %v624
      %v626 = vpop.f32.mrf.mxu0
      %627 = vmatprep.mubr.bf16.mxu0 0
      %628 = vmatmul.mubr.bf16.gmra.mxu0 %v574
      %v629 = vpop.f32.mrf.mxu0
      %v630 = vadd.f32 0.0, %v629
      %v631 = vpop.f32.mrf.mxu0
      %v632 = vpop.f32.mrf.mxu0
      %v633 = vadd.f32 0.0, %v632
      %v634 = vpop.f32.mrf.mxu0
      %635 = vmatprep.mubr.bf16.mxu0 0
      %636 = vmatmul.mubr.bf16.gmra.mxu0 %v577
      %v637 = vpop.f32.mrf.mxu0
      %v638 = vadd.f32 0.0, %v637
      %v639 = vpop.f32.mrf.mxu0
      %v640 = vpop.f32.mrf.mxu0
      %v641 = vadd.f32 0.0, %v640
      %v642 = vpop.f32.mrf.mxu0
      %643 = vdwg.mxu0
      %v652 = vunpack.c.l.b16 %v513
      %v653 = vunpack.c.l.b16 %v514
      %v654 = vunpack.c.l.b16 %v515
      %v655 = vunpack.c.l.b16 %v516
      %v656 = vunpack.c.l.b16 %v517
      %v657 = vunpack.c.l.b16 %v518
      %v658 = vunpack.c.l.b16 %v519
      %v659 = vunpack.c.l.b16 %v520
      %v660 = vpack.c.b16 %v653, %v652
      %v661 = vpack.c.b16 %v655, %v654
      %v662 = vpack.c.b16 %v657, %v656
      %v663 = vpack.c.b16 %v659, %v658
      %vm664 = vcmask 31744
      %v666 = vsel %vm664, %v660, 0
      %v669 = vsel %vm664, %v661, 0
      %v672 = vsel %vm664, %v662, 0
      %v675 = vsel %vm664, %v663, 0
      %vm677 = vcmask 1041408
      %v679 = vsel %vm677, %v521, 0
      %681 = vmatprep.subr.bf16.mxu0 0
      %682 = vmatpush1.bf16.msra.mxu0 0
      %683 = vmatprep.subr.bf16.mxu0 0
      %684 = vmatpush1.bf16.msra.mxu0 0
      %685 = vmatprep.subr.bf16.mxu0 0
      %686 = vmatpush1.bf16.msra.mxu0 0
      %687 = vmatprep.subr.bf16.mxu0 0
      %688 = vmatpush1.bf16.msra.mxu0 0
      %689 = vmatprep.subr.bf16.mxu0 0
      %690 = vmatpush1.bf16.msra.mxu0 0
      %691 = vmatprep.subr.bf16.mxu0 0
      %692 = vmatpush1.bf16.msra.mxu0 0
      %693 = vmatprep.subr.bf16.mxu0 0
      %694 = vmatpush1.bf16.msra.mxu0 0
      %695 = vmatprep.subr.bf16.mxu0 0
      %696 = vmatpush1.bf16.msra.mxu0 %v679
      %697 = vmatprep.subr.bf16.mxu0 0
      %698 = vmatpush2.bf16.msra.mxu0 0
      %699 = vmatprep.subr.bf16.mxu0 0
      %700 = vmatpush2.bf16.msra.mxu0 0
      %701 = vmatprep.subr.bf16.mxu0 0
      %702 = vmatpush2.bf16.msra.mxu0 0
      %703 = vmatprep.subr.bf16.mxu0 0
      %704 = vmatpush2.bf16.msra.mxu0 0
      %705 = vmatprep.subr.bf16.mxu0 0
      %706 = vmatpush2.bf16.msra.mxu0 0
      %707 = vmatprep.subr.bf16.mxu0 0
      %708 = vmatpush2.bf16.msra.mxu0 0
      %709 = vmatprep.subr.bf16.mxu0 0
      %710 = vmatpush2.bf16.msra.mxu0 0
      %711 = vmatprep.subr.bf16.mxu0 0
      %712 = vmatpush2.bf16.msra.mxu0 0
      %713 = vmatprep.mubr.bf16.mxu0 0
      %714 = vmatmul.mubr.bf16.gmra.mxu0 %v666
      %v715 = vpop.f32.mrf.mxu0
      %v716 = vadd.f32 %v614, %v715
      %v717 = vpop.f32.mrf.mxu0
      %v718 = vpop.f32.mrf.mxu0
      %v719 = vadd.f32 %v617, %v718
      %v720 = vpop.f32.mrf.mxu0
      %721 = vmatprep.mubr.bf16.mxu0 0
      %722 = vmatmul.mubr.bf16.gmra.mxu0 %v669
      %v723 = vpop.f32.mrf.mxu0
      %v724 = vadd.f32 %v622, %v723
      %v725 = vpop.f32.mrf.mxu0
      %v726 = vpop.f32.mrf.mxu0
      %v727 = vadd.f32 %v625, %v726
      %v728 = vpop.f32.mrf.mxu0
      %729 = vmatprep.mubr.bf16.mxu0 0
      %730 = vmatmul.mubr.bf16.gmra.mxu0 %v672
      %v731 = vpop.f32.mrf.mxu0
      %v732 = vadd.f32 %v630, %v731
      %v733 = vpop.f32.mrf.mxu0
      %v734 = vpop.f32.mrf.mxu0
      %v735 = vadd.f32 %v633, %v734
      %v736 = vpop.f32.mrf.mxu0
      %737 = vmatprep.mubr.bf16.mxu0 0
      %738 = vmatmul.mubr.bf16.gmra.mxu0 %v675
      %v739 = vpop.f32.mrf.mxu0
      %v740 = vadd.f32 %v638, %v739
      %v741 = vpop.f32.mrf.mxu0
      %v742 = vpop.f32.mrf.mxu0
      %v743 = vadd.f32 %v641, %v742
      %v744 = vpop.f32.mrf.mxu0
      %745 = vdwg.mxu0
      %v746 = vld [vmem:[%s498] sm:$0xf]
      %v747 = vld [vmem:[%s498 + $0x4] sm:$0xf]
      %v748 = vld [vmem:[%s498 + $0x8] sm:$0xf]
      %v749 = vld [vmem:[%s498 + $0xc] sm:$0xf]
      %v750 = vld [vmem:[%s498 + $0x10] sm:$0xf]
      %v751 = vld [vmem:[%s498 + $0x14] sm:$0xf]
      %v752 = vld [vmem:[%s498 + $0x18] sm:$0xf]
      %v753 = vld [vmem:[%s498 + $0x1c] sm:$0xf]
      %v754 = vld [vmem:[%s6] sm:$0xf]
      %v755 = vld [vmem:[%s6 + $0x4] sm:$0x3]
      %v764 = vunpack.c.l.b16 %v746
      %v765 = vunpack.c.l.b16 %v747
      %v766 = vunpack.c.l.b16 %v748
      %v767 = vunpack.c.l.b16 %v749
      %v768 = vunpack.c.l.b16 %v750
      %v769 = vunpack.c.l.b16 %v751
      %v770 = vunpack.c.l.b16 %v752
      %v771 = vunpack.c.l.b16 %v753
      %v772 = vpack.c.b16 %v765, %v764
      %v773 = vpack.c.b16 %v767, %v766
      %v774 = vpack.c.b16 %v769, %v768
      %v775 = vpack.c.b16 %v771, %v770
      %v778 = vunpack.c.l.b16 %v754
      %v779 = vunpack.c.l.b16 %v755
      %v780 = vpack.c.b16 %v779, %v778
      %vm781 = vcmask 97280
      %v783 = vsel %vm781, %v772, 0
      %v786 = vsel %vm781, %v773, 0
      %v789 = vsel %vm781, %v774, 0
      %v792 = vsel %vm781, %v775, 0
      %vm794 = vcmask 1045504
      %v796 = vsel %vm794, %v780, 0
      %798 = vmatprep.subr.bf16.mxu0 0
      %799 = vmatpush1.bf16.msra.mxu0 0
      %800 = vmatprep.subr.bf16.mxu0 0
      %801 = vmatpush1.bf16.msra.mxu0 0
      %802 = vmatprep.subr.bf16.mxu0 0
      %803 = vmatpush1.bf16.msra.mxu0 0
      %804 = vmatprep.subr.bf16.mxu0 0
      %805 = vmatpush1.bf16.msra.mxu0 0
      %806 = vmatprep.subr.bf16.mxu0 0
      %807 = vmatpush1.bf16.msra.mxu0 0
      %808 = vmatprep.subr.bf16.mxu0 0
      %809 = vmatpush1.bf16.msra.mxu0 0
      %810 = vmatprep.subr.bf16.mxu0 0
      %811 = vmatpush1.bf16.msra.mxu0 0
      %812 = vmatprep.subr.bf16.mxu0 0
      %813 = vmatpush1.bf16.msra.mxu0 %v796
      %814 = vmatprep.subr.bf16.mxu0 0
      %815 = vmatpush2.bf16.msra.mxu0 0
      %816 = vmatprep.subr.bf16.mxu0 0
      %817 = vmatpush2.bf16.msra.mxu0 0
      %818 = vmatprep.subr.bf16.mxu0 0
      %819 = vmatpush2.bf16.msra.mxu0 0
      %820 = vmatprep.subr.bf16.mxu0 0
      %821 = vmatpush2.bf16.msra.mxu0 0
      %822 = vmatprep.subr.bf16.mxu0 0
      %823 = vmatpush2.bf16.msra.mxu0 0
      %824 = vmatprep.subr.bf16.mxu0 0
      %825 = vmatpush2.bf16.msra.mxu0 0
      %826 = vmatprep.subr.bf16.mxu0 0
      %827 = vmatpush2.bf16.msra.mxu0 0
      %828 = vmatprep.subr.bf16.mxu0 0
      %829 = vmatpush2.bf16.msra.mxu0 0
      %830 = vmatprep.mubr.bf16.mxu0 0
      %831 = vmatmul.mubr.bf16.gmra.mxu0 %v783
      %v832 = vpop.f32.mrf.mxu0
      %v833 = vadd.f32 0.0, %v832
      %v834 = vpop.f32.mrf.mxu0
      %v835 = vpop.f32.mrf.mxu0
      %v836 = vadd.f32 0.0, %v835
      %v837 = vpop.f32.mrf.mxu0
      %838 = vmatprep.mubr.bf16.mxu0 0
      %839 = vmatmul.mubr.bf16.gmra.mxu0 %v786
      %v840 = vpop.f32.mrf.mxu0
      %v841 = vadd.f32 0.0, %v840
      %v842 = vpop.f32.mrf.mxu0
      %v843 = vpop.f32.mrf.mxu0
      %v844 = vadd.f32 0.0, %v843
      %v845 = vpop.f32.mrf.mxu0
      %846 = vmatprep.mubr.bf16.mxu0 0
      %847 = vmatmul.mubr.bf16.gmra.mxu0 %v789
      %v848 = vpop.f32.mrf.mxu0
      %v849 = vadd.f32 0.0, %v848
      %v850 = vpop.f32.mrf.mxu0
      %v851 = vpop.f32.mrf.mxu0
      %v852 = vadd.f32 0.0, %v851
      %v853 = vpop.f32.mrf.mxu0
      %854 = vmatprep.mubr.bf16.mxu0 0
      %855 = vmatmul.mubr.bf16.gmra.mxu0 %v792
      %v856 = vpop.f32.mrf.mxu0
      %v857 = vadd.f32 0.0, %v856
      %v858 = vpop.f32.mrf.mxu0
      %v859 = vpop.f32.mrf.mxu0
      %v860 = vadd.f32 0.0, %v859
      %v861 = vpop.f32.mrf.mxu0
      %862 = vdwg.mxu0
      %v863 = vadd.f32 %v716, %v833
      %v864 = vadd.f32 %v719, %v836
      %v865 = vadd.f32 %v724, %v841
      %v866 = vadd.f32 %v727, %v844
      %v867 = vadd.f32 %v732, %v849
      %v868 = vadd.f32 %v735, %v852
      %v869 = vadd.f32 %v740, %v857
      %v870 = vadd.f32 %v743, %v860
      %v871 = vld [vmem:[%s504] sm:$0xf]
      %v872 = vld [vmem:[%s504 + $0x4] sm:$0xf]
      %v873 = vld [vmem:[%s504 + $0x8] sm:$0xf]
      %v874 = vld [vmem:[%s504 + $0xc] sm:$0xf]
      %v875 = vld [vmem:[%s504 + $0x10] sm:$0xf]
      %v876 = vld [vmem:[%s504 + $0x14] sm:$0xf]
      %v877 = vld [vmem:[%s504 + $0x18] sm:$0xf]
      %v878 = vld [vmem:[%s504 + $0x1c] sm:$0xf]
      %v879 = vld [vmem:[%s7] sm:$0x7]
      %v888 = vunpack.c.l.b16 %v871
      %v889 = vunpack.c.l.b16 %v872
      %v890 = vunpack.c.l.b16 %v873
      %v891 = vunpack.c.l.b16 %v874
      %v892 = vunpack.c.l.b16 %v875
      %v893 = vunpack.c.l.b16 %v876
      %v894 = vunpack.c.l.b16 %v877
      %v895 = vunpack.c.l.b16 %v878
      %v896 = vpack.c.b16 %v889, %v888
      %v897 = vpack.c.b16 %v891, %v890
      %v898 = vpack.c.b16 %v893, %v892
      %v899 = vpack.c.b16 %v895, %v894
      %vm900 = vcmask 48128
      %v902 = vsel %vm900, %v896, 0
      %v905 = vsel %vm900, %v897, 0
      %v908 = vsel %vm900, %v898, 0
      %v911 = vsel %vm900, %v899, 0
      %vm913 = vcmask 1042432
      %v915 = vsel %vm913, %v879, 0
      %917 = vmatprep.subr.bf16.mxu0 0
      %918 = vmatpush1.bf16.msra.mxu0 0
      %919 = vmatprep.subr.bf16.mxu0 0
      %920 = vmatpush1.bf16.msra.mxu0 0
      %921 = vmatprep.subr.bf16.mxu0 0
      %922 = vmatpush1.bf16.msra.mxu0 0
      %923 = vmatprep.subr.bf16.mxu0 0
      %924 = vmatpush1.bf16.msra.mxu0 0
      %925 = vmatprep.subr.bf16.mxu0 0
      %926 = vmatpush1.bf16.msra.mxu0 0
      %927 = vmatprep.subr.bf16.mxu0 0
      %928 = vmatpush1.bf16.msra.mxu0 0
      %929 = vmatprep.subr.bf16.mxu0 0
      %930 = vmatpush1.bf16.msra.mxu0 0
      %931 = vmatprep.subr.bf16.mxu0 0
      %932 = vmatpush1.bf16.msra.mxu0 %v915
      %933 = vmatprep.subr.bf16.mxu0 0
      %934 = vmatpush2.bf16.msra.mxu0 0
      %935 = vmatprep.subr.bf16.mxu0 0
      %936 = vmatpush2.bf16.msra.mxu0 0
      %937 = vmatprep.subr.bf16.mxu0 0
      %938 = vmatpush2.bf16.msra.mxu0 0
      %939 = vmatprep.subr.bf16.mxu0 0
      %940 = vmatpush2.bf16.msra.mxu0 0
      %941 = vmatprep.subr.bf16.mxu0 0
      %942 = vmatpush2.bf16.msra.mxu0 0
      %943 = vmatprep.subr.bf16.mxu0 0
      %944 = vmatpush2.bf16.msra.mxu0 0
      %945 = vmatprep.subr.bf16.mxu0 0
      %946 = vmatpush2.bf16.msra.mxu0 0
      %947 = vmatprep.subr.bf16.mxu0 0
      %948 = vmatpush2.bf16.msra.mxu0 0
      %949 = vmatprep.mubr.bf16.mxu0 0
      %950 = vmatmul.mubr.bf16.gmra.mxu0 %v902
      %v951 = vpop.f32.mrf.mxu0
      %v952 = vadd.f32 0.0, %v951
      %v953 = vpop.f32.mrf.mxu0
      %v954 = vpop.f32.mrf.mxu0
      %v955 = vadd.f32 0.0, %v954
      %v956 = vpop.f32.mrf.mxu0
      %957 = vmatprep.mubr.bf16.mxu0 0
      %958 = vmatmul.mubr.bf16.gmra.mxu0 %v905
      %v959 = vpop.f32.mrf.mxu0
      %v960 = vadd.f32 0.0, %v959
      %v961 = vpop.f32.mrf.mxu0
      %v962 = vpop.f32.mrf.mxu0
      %v963 = vadd.f32 0.0, %v962
      %v964 = vpop.f32.mrf.mxu0
      %965 = vmatprep.mubr.bf16.mxu0 0
      %966 = vmatmul.mubr.bf16.gmra.mxu0 %v908
      %v967 = vpop.f32.mrf.mxu0
      %v968 = vadd.f32 0.0, %v967
      %v969 = vpop.f32.mrf.mxu0
      %v970 = vpop.f32.mrf.mxu0
      %v971 = vadd.f32 0.0, %v970
      %v972 = vpop.f32.mrf.mxu0
      %973 = vmatprep.mubr.bf16.mxu0 0
      %974 = vmatmul.mubr.bf16.gmra.mxu0 %v911
      %v975 = vpop.f32.mrf.mxu0
      %v976 = vadd.f32 0.0, %v975
      %v977 = vpop.f32.mrf.mxu0
      %v978 = vpop.f32.mrf.mxu0
      %v979 = vadd.f32 0.0, %v978
      %v980 = vpop.f32.mrf.mxu0
      %981 = vdwg.mxu0
      %v982 = vadd.f32 %v863, %v952
      %v983 = vadd.f32 %v864, %v955
      %v984 = vadd.f32 %v865, %v960
      %v985 = vadd.f32 %v866, %v963
      %v986 = vadd.f32 %v867, %v968
      %v987 = vadd.f32 %v868, %v971
      %v988 = vadd.f32 %v869, %v976
      %v989 = vadd.f32 %v870, %v979
      %v990 = vld [vmem:[%s8] sm:$0x1]
      %v992 = vlaneseq
      %v993 = vshrl.u32 %v992, 7
      %v994 = vsub.s32 0, %v993
      %v995 = vrot.slane %v990, %v994
      %v997 = vadd.f32 %v982, %v995
      %v998 = vadd.f32 %v983, %v995
      %v999 = vadd.f32 %v984, %v995
      %v1000 = vadd.f32 %v985, %v995
      %v1001 = vadd.f32 %v986, %v995
      %v1002 = vadd.f32 %v987, %v995
      %v1003 = vadd.f32 %v988, %v995
      %v1004 = vadd.f32 %v989, %v995
      %v1005 = vmax.f32 %v997, 0.0
      %v1006 = vmax.f32 %v998, 0.0
      %v1007 = vmax.f32 %v999, 0.0
      %v1008 = vmax.f32 %v1000, 0.0
      %v1009 = vmax.f32 %v1001, 0.0
      %v1010 = vmax.f32 %v1002, 0.0
      %v1011 = vmax.f32 %v1003, 0.0
      %v1012 = vmax.f32 %v1004, 0.0
      %v1013 = vpack.c.bf16 %v1006, %v1005
      %v1014 = vpack.c.bf16 %v1008, %v1007
      %v1015 = vpack.c.bf16 %v1010, %v1009
      %v1016 = vpack.c.bf16 %v1012, %v1011
      %v1017 = vld [vmem:[%s9] sm:$0xf]
      %v1018 = vld [vmem:[%s9 + $0x4] sm:$0xf]
      %v1019 = vld [vmem:[%s9 + $0x8] sm:$0xf]
      %v1020 = vld [vmem:[%s9 + $0xc] sm:$0xf]
      %v1021 = vld [vmem:[%s10] sm:$0x1]
      %v1023 = vlaneseq
      %v1024 = vshrl.u32 %v1023, 7
      %v1025 = vsub.s32 0, %v1024
      %v1026 = vrot.slane %v1021, %v1025
      %v1032 = vunpack.c.l.b16 %v1017
      %v1033 = vunpack.c.l.b16 %v1018
      %v1034 = vunpack.c.l.b16 %v1019
      %v1035 = vunpack.c.l.b16 %v1020
      %v1036 = vpack.c.b16 %v1033, %v1032
      %v1037 = vpack.c.b16 %v1035, %v1034
      %v1041 = vsel %vm566, %v1013, 0
      %v1044 = vsel %vm566, %v1014, 0
      %v1047 = vsel %vm566, %v1015, 0
      %v1050 = vsel %vm566, %v1016, 0
      %1052 = vmatprep.subr.bf16.mxu0 0
      %1053 = vmatpush1.bf16.msra.mxu0 0
      %1054 = vmatprep.subr.bf16.mxu0 0
      %1055 = vmatpush1.bf16.msra.mxu0 0
      %1056 = vmatprep.subr.bf16.mxu0 0
      %1057 = vmatpush1.bf16.msra.mxu0 0
      %1058 = vmatprep.subr.bf16.mxu0 0
      %1059 = vmatpush1.bf16.msra.mxu0 0
      %1060 = vmatprep.subr.bf16.mxu0 0
      %1061 = vmatpush1.bf16.msra.mxu0 0
      %1062 = vmatprep.subr.bf16.mxu0 0
      %1063 = vmatpush1.bf16.msra.mxu0 0
      %1064 = vmatprep.subr.bf16.mxu0 0
      %1065 = vmatpush1.bf16.msra.mxu0 %v1037
      %1066 = vmatprep.subr.bf16.mxu0 0
      %1067 = vmatpush1.bf16.msra.mxu0 %v1036
      %1068 = vmatprep.subr.bf16.mxu0 0
      %1069 = vmatpush2.bf16.msra.mxu0 0
      %1070 = vmatprep.subr.bf16.mxu0 0
      %1071 = vmatpush2.bf16.msra.mxu0 0
      %1072 = vmatprep.subr.bf16.mxu0 0
      %1073 = vmatpush2.bf16.msra.mxu0 0
      %1074 = vmatprep.subr.bf16.mxu0 0
      %1075 = vmatpush2.bf16.msra.mxu0 0
      %1076 = vmatprep.subr.bf16.mxu0 0
      %1077 = vmatpush2.bf16.msra.mxu0 0
      %1078 = vmatprep.subr.bf16.mxu0 0
      %1079 = vmatpush2.bf16.msra.mxu0 0
      %1080 = vmatprep.subr.bf16.mxu0 0
      %1081 = vmatpush2.bf16.msra.mxu0 0
      %1082 = vmatprep.subr.bf16.mxu0 0
      %1083 = vmatpush2.bf16.msra.mxu0 0
      %1084 = vmatprep.mubr.bf16.mxu0 0
      %1085 = vmatmul.mubr.bf16.gmra.mxu0 %v1041
      %v1086 = vpop.f32.mrf.mxu0
      %v1087 = vadd.f32 %v1026, %v1086
      %v1088 = vpop.f32.mrf.mxu0
      %v1089 = vpop.f32.mrf.mxu0
      %v1090 = vadd.f32 %v1026, %v1089
      %v1091 = vpop.f32.mrf.mxu0
      %1092 = vmatprep.mubr.bf16.mxu0 0
      %1093 = vmatmul.mubr.bf16.gmra.mxu0 %v1044
      %v1094 = vpop.f32.mrf.mxu0
      %v1095 = vadd.f32 %v1026, %v1094
      %v1096 = vpop.f32.mrf.mxu0
      %v1097 = vpop.f32.mrf.mxu0
      %v1098 = vadd.f32 %v1026, %v1097
      %v1099 = vpop.f32.mrf.mxu0
      %1100 = vmatprep.mubr.bf16.mxu0 0
      %1101 = vmatmul.mubr.bf16.gmra.mxu0 %v1047
      %v1102 = vpop.f32.mrf.mxu0
      %v1103 = vadd.f32 %v1026, %v1102
      %v1104 = vpop.f32.mrf.mxu0
      %v1105 = vpop.f32.mrf.mxu0
      %v1106 = vadd.f32 %v1026, %v1105
      %v1107 = vpop.f32.mrf.mxu0
      %1108 = vmatprep.mubr.bf16.mxu0 0
      %1109 = vmatmul.mubr.bf16.gmra.mxu0 %v1050
      %v1110 = vpop.f32.mrf.mxu0
      %v1111 = vadd.f32 %v1026, %v1110
      %v1112 = vpop.f32.mrf.mxu0
      %v1113 = vpop.f32.mrf.mxu0
      %v1114 = vadd.f32 %v1026, %v1113
      %v1115 = vpop.f32.mrf.mxu0
      %1116 = vdwg.mxu0
      %v1117 = vmax.f32 %v1087, 0.0
      %v1118 = vmax.f32 %v1090, 0.0
      %v1119 = vmax.f32 %v1095, 0.0
      %v1120 = vmax.f32 %v1098, 0.0
      %v1121 = vmax.f32 %v1103, 0.0
      %v1122 = vmax.f32 %v1106, 0.0
      %v1123 = vmax.f32 %v1111, 0.0
      %v1124 = vmax.f32 %v1114, 0.0
      %v1125 = vpack.c.bf16 %v1118, %v1117
      %v1126 = vpack.c.bf16 %v1120, %v1119
      %v1127 = vpack.c.bf16 %v1122, %v1121
      %v1128 = vpack.c.bf16 %v1124, %v1123
      %v1129 = vld [vmem:[%s11] sm:$0xf]
      %v1130 = vld [vmem:[%s11 + $0x4] sm:$0xf]
      %v1131 = vld [vmem:[%s11 + $0x8] sm:$0xf]
      %v1132 = vld [vmem:[%s11 + $0xc] sm:$0xf]
      %v1133 = vld [vmem:[#allocation2] sm:$0x1]
      %v1135 = vlaneseq
      %v1136 = vshrl.u32 %v1135, 7
      %v1137 = vsub.s32 0, %v1136
      %v1138 = vrot.slane %v1133, %v1137
      %v1144 = vunpack.c.l.b16 %v1129
      %v1145 = vunpack.c.l.b16 %v1130
      %v1146 = vunpack.c.l.b16 %v1131
      %v1147 = vunpack.c.l.b16 %v1132
      %v1148 = vpack.c.b16 %v1145, %v1144
      %v1149 = vpack.c.b16 %v1147, %v1146
      %v1153 = vsel %vm566, %v1125, 0
      %v1156 = vsel %vm566, %v1126, 0
      %v1159 = vsel %vm566, %v1127, 0
      %v1162 = vsel %vm566, %v1128, 0
      %1164 = vmatprep.subr.bf16.mxu0 0
      %1165 = vmatpush1.bf16.msra.mxu0 0
      %1166 = vmatprep.subr.bf16.mxu0 0
      %1167 = vmatpush1.bf16.msra.mxu0 0
      %1168 = vmatprep.subr.bf16.mxu0 0
      %1169 = vmatpush1.bf16.msra.mxu0 0
      %1170 = vmatprep.subr.bf16.mxu0 0
      %1171 = vmatpush1.bf16.msra.mxu0 0
      %1172 = vmatprep.subr.bf16.mxu0 0
      %1173 = vmatpush1.bf16.msra.mxu0 0
      %1174 = vmatprep.subr.bf16.mxu0 0
      %1175 = vmatpush1.bf16.msra.mxu0 0
      %1176 = vmatprep.subr.bf16.mxu0 0
      %1177 = vmatpush1.bf16.msra.mxu0 %v1149
      %1178 = vmatprep.subr.bf16.mxu0 0
      %1179 = vmatpush1.bf16.msra.mxu0 %v1148
      %1180 = vmatprep.subr.bf16.mxu0 0
      %1181 = vmatpush2.bf16.msra.mxu0 0
      %1182 = vmatprep.subr.bf16.mxu0 0
      %1183 = vmatpush2.bf16.msra.mxu0 0
      %1184 = vmatprep.subr.bf16.mxu0 0
      %1185 = vmatpush2.bf16.msra.mxu0 0
      %1186 = vmatprep.subr.bf16.mxu0 0
      %1187 = vmatpush2.bf16.msra.mxu0 0
      %1188 = vmatprep.subr.bf16.mxu0 0
      %1189 = vmatpush2.bf16.msra.mxu0 0
      %1190 = vmatprep.subr.bf16.mxu0 0
      %1191 = vmatpush2.bf16.msra.mxu0 0
      %1192 = vmatprep.subr.bf16.mxu0 0
      %1193 = vmatpush2.bf16.msra.mxu0 0
      %1194 = vmatprep.subr.bf16.mxu0 0
      %1195 = vmatpush2.bf16.msra.mxu0 0
      %1196 = vmatprep.mubr.bf16.mxu0 0
      %1197 = vmatmul.mubr.bf16.gmra.mxu0 %v1153
      %v1198 = vpop.f32.mrf.mxu0
      %v1199 = vadd.f32 %v1138, %v1198
      %v1200 = vpop.f32.mrf.mxu0
      %v1201 = vpop.f32.mrf.mxu0
      %v1202 = vadd.f32 %v1138, %v1201
      %v1203 = vpop.f32.mrf.mxu0
      %1204 = vmatprep.mubr.bf16.mxu0 0
      %1205 = vmatmul.mubr.bf16.gmra.mxu0 %v1156
      %v1206 = vpop.f32.mrf.mxu0
      %v1207 = vadd.f32 %v1138, %v1206
      %v1208 = vpop.f32.mrf.mxu0
      %v1209 = vpop.f32.mrf.mxu0
      %v1210 = vadd.f32 %v1138, %v1209
      %v1211 = vpop.f32.mrf.mxu0
      %1212 = vmatprep.mubr.bf16.mxu0 0
      %1213 = vmatmul.mubr.bf16.gmra.mxu0 %v1159
      %v1214 = vpop.f32.mrf.mxu0
      %v1215 = vadd.f32 %v1138, %v1214
      %v1216 = vpop.f32.mrf.mxu0
      %v1217 = vpop.f32.mrf.mxu0
      %v1218 = vadd.f32 %v1138, %v1217
      %v1219 = vpop.f32.mrf.mxu0
      %1220 = vmatprep.mubr.bf16.mxu0 0
      %1221 = vmatmul.mubr.bf16.gmra.mxu0 %v1162
      %v1222 = vpop.f32.mrf.mxu0
      %v1223 = vadd.f32 %v1138, %v1222
      %v1224 = vpop.f32.mrf.mxu0
      %v1225 = vpop.f32.mrf.mxu0
      %v1226 = vadd.f32 %v1138, %v1225
      %v1227 = vpop.f32.mrf.mxu0
      %1228 = vdwg.mxu0
      %v1229 = vsub.f32 0.0, %v1199
      %v1230 = vsub.f32 0.0, %v1202
      %v1231 = vsub.f32 0.0, %v1207
      %v1232 = vsub.f32 0.0, %v1210
      %v1233 = vsub.f32 0.0, %v1215
      %v1234 = vsub.f32 0.0, %v1218
      %v1235 = vsub.f32 0.0, %v1223
      %v1236 = vsub.f32 0.0, %v1226
      %v1237 = vmul.f32 %v1229, 1.442695
      %v1238 = vpow.pop %v1237
      %v1239 = vmul.f32 %v1230, 1.442695
      %v1240 = vpow.pop %v1239
      %v1241 = vmul.f32 %v1231, 1.442695
      %v1242 = vpow.pop %v1241
      %v1243 = vmul.f32 %v1232, 1.442695
      %v1244 = vpow.pop %v1243
      %v1245 = vmul.f32 %v1233, 1.442695
      %v1246 = vpow.pop %v1245
      %v1247 = vmul.f32 %v1234, 1.442695
      %v1248 = vpow.pop %v1247
      %v1249 = vmul.f32 %v1235, 1.442695
      %v1250 = vpow.pop %v1249
      %v1251 = vmul.f32 %v1236, 1.442695
      %v1252 = vpow.pop %v1251
      %v1253 = vadd.f32 %v1238, 1.0
      %v1254 = vadd.f32 %v1240, 1.0
      %v1255 = vadd.f32 %v1242, 1.0
      %v1256 = vadd.f32 %v1244, 1.0
      %v1257 = vadd.f32 %v1246, 1.0
      %v1258 = vadd.f32 %v1248, 1.0
      %v1259 = vadd.f32 %v1250, 1.0
      %v1260 = vadd.f32 %v1252, 1.0
      %v1261 = vrcp.pop %v1253
      %v1262 = vrcp.pop %v1254
      %v1263 = vrcp.pop %v1255
      %v1264 = vrcp.pop %v1256
      %v1265 = vrcp.pop %v1257
      %v1266 = vrcp.pop %v1258
      %v1267 = vrcp.pop %v1259
      %v1268 = vrcp.pop %v1260
      %vm1269 = vcmask 7168
      %1270 = vst.msk [vmem:[%s510] sm:$0xff] %vm1269, %v1261
      %1271 = vst.msk [vmem:[%s510 + $0x8] sm:$0xff] %vm1269, %v1262
      %1272 = vst.msk [vmem:[%s510 + $0x10] sm:$0xff] %vm1269, %v1263
      %1273 = vst.msk [vmem:[%s510 + $0x18] sm:$0xff] %vm1269, %v1264
      %1274 = vst.msk [vmem:[%s510 + $0x20] sm:$0xff] %vm1269, %v1265
      %1275 = vst.msk [vmem:[%s510 + $0x28] sm:$0xff] %vm1269, %v1266
      %1276 = vst.msk [vmem:[%s510 + $0x30] sm:$0xff] %vm1269, %v1267
      %1277 = vst.msk [vmem:[%s510 + $0x38] sm:$0xff] %vm1269, %v1268
      %s1278 = smul.u32 8, %s26
      %p1279 = scmp.lt.s32.totalorder %s1278, 31
      %s1280 = scalar_select %p1279, %s1278, 31
      %s1281 = smul.addr %s1280, 8
      %s1282 = scalar_lea.vmem %s13, %s1281
      // Predicated region
      $region73: #{tpu_custom_call.1} parent=71 // pred_check
        %p1283 = pneg %p337
      $region74: #{tpu_custom_call.1} parent=71 // pred_check_branch
        %1285 = sbr.rel (%p1283) target = $region76
      $region75: #{tpu_custom_call.1} parent=71 // pred_region
        %s1286 = smul.u32 8, %s26
      $region76: #{tpu_custom_call.1} parent=71 // pred_fallthru
        _
    $region72: #{tpu_custom_call.1} parent=5 // pred_fallthru
      _
    %p1287 = scmp.le.s32.totalorder 2, %s21
    // Predicated region
    $region77: #{tpu_custom_call.1} parent=5 // pred_check
      %p1288 = pneg %p1287
    $region78: #{tpu_custom_call.1} parent=5 // pred_check_branch
      %1290 = sbr.rel (%p1288) target = $region80
    $region79: #{tpu_custom_call.1} parent=5 // pred_region
      %s1291 = ssub.s32 %s21, 2
      // Predicated region
      $region81: #{tpu_custom_call.1} parent=79 // pred_check
        %p1292 = pneg %p343
      $region82: #{tpu_custom_call.1} parent=79 // pred_check_branch
        %1294 = sbr.rel (%p1292) target = $region84
      $region83: #{tpu_custom_call.1} parent=79 // pred_region
        %s1295 = smul.u32 8, %s27
        %p1296 = scmp.lt.s32.totalorder %s1295, 31
        %s1297 = scalar_select %p1296, %s1295, 31
        %s1298 = smul.addr %s1297, 8
        %s1299 = scalar_lea.vmem %s13, %s1298
      $region84: #{tpu_custom_call.1} parent=79 // pred_fallthru
        _
    $region80: #{tpu_custom_call.1} parent=5 // pred_fallthru
      _
  $region6: #{tpu_custom_call.1} parent=0 // loop_footer
    %s25 = sadd.s32 1, %s21
  $region7: #{tpu_custom_call.1} parent=0 // loop_footer_branch
    %20 = sbr.rel target = $region3
  $region8: #{tpu_custom_call.1} parent=0 // loop_exit
    _

</llo_original>
